<compile_context>
chip_gen: v7x
topology: tpu7x:2x2x1
jax: 0.10.0
libtpu: 0.0.40
codegen_flags: <defaults>
</compile_context>

<pallas_src>
import jax
import jax.numpy as jnp
from jax.experimental import pallas as pl
from jax.experimental.pallas import tpu as pltpu

BN_EPS = 1e-5  # PyTorch BatchNorm1d default eps

NUM_CONTEXT_FEATURES = 32
NUM_BODY_FEATURES = 32
NUM_FACE_FEATURES = 16
NUM_CAPTION_FEATURES = 16
FUSE_DIM = 256
NUM_CAT = 26
NUM_CONT = 3
HEAD_PAD = 128  # 26 + 3 = 29 output lanes, padded to 128 for unmasked lane-dense stores


def _round_up(x, m):
    return ((x + m - 1) // m) * m


def _emotic_kernel(ctx_ref, body_ref, face_ref,
                   wc_ref, wb_ref, wf_ref, b_fuse_ref,
                   w_head_ref, b_head_ref, out_ref):
    f32 = jnp.float32
    # Per-channel spatial SUMS (XLU cross-lane reduce). The GAP's 1/HW is pre-folded into
    # the per-stream weights, so no division is needed here.
    g_ctx = jnp.sum(ctx_ref[...].astype(f32), axis=-1)     # (bn, C_ctx)
    g_body = jnp.sum(body_ref[...].astype(f32), axis=-1)   # (bn, C_body)
    g_face = jnp.sum(face_ref[...].astype(f32), axis=-1)   # (bn, C_face)
    # backbones + concat + fuse Linear + eval-mode BatchNorm, folded into 3 tiny matmuls
    z = (jnp.dot(g_ctx, wc_ref[...], preferred_element_type=f32)
         + jnp.dot(g_body, wb_ref[...], preferred_element_type=f32)
         + jnp.dot(g_face, wf_ref[...], preferred_element_type=f32)
         + b_fuse_ref[...])                                 # (bn, 256)
    h = jnp.maximum(z, 0.0)                                 # ReLU (Dropout eval = identity)
    # fc_cat | fc_cont stacked into one lane-dense head matmul
    out_ref[...] = (jnp.dot(h, w_head_ref[...], preferred_element_type=f32)
                    + b_head_ref[...])


def init_params(key):
    ks = jax.random.split(key, 16)
    s = 0.05

    def lin(k, cin, cout):
        kw, kb = jax.random.split(k)
        return (jax.random.normal(kw, (cin, cout), jnp.float32) * s,
                jax.random.normal(kb, (cout,), jnp.float32) * s)

    p = {}
    p["wc"], p["bc"] = lin(ks[0], 4, NUM_CONTEXT_FEATURES)
    p["wb"], p["bb"] = lin(ks[1], 4, NUM_BODY_FEATURES)
    p["wf"], p["bf"] = lin(ks[2], 4, NUM_FACE_FEATURES)
    p["wcap"], p["bcap"] = lin(ks[3], 4, NUM_CAPTION_FEATURES)

    fuse_in = NUM_CONTEXT_FEATURES + NUM_BODY_FEATURES + NUM_FACE_FEATURES + NUM_CAPTION_FEATURES
    p["wfu"], p["bfu"] = lin(ks[4], fuse_in, FUSE_DIM)

    p["bn_g"] = 1.0 + 0.1 * jax.random.normal(ks[5], (FUSE_DIM,), jnp.float32)
    p["bn_b"] = 0.1 * jax.random.normal(ks[6], (FUSE_DIM,), jnp.float32)
    p["bn_m"] = 0.1 * jax.random.normal(ks[7], (FUSE_DIM,), jnp.float32)
    p["bn_v"] = 0.5 + jnp.abs(jax.random.normal(ks[8], (FUSE_DIM,), jnp.float32)) * 0.5

    p["wcat"], p["bcat"] = lin(ks[9], FUSE_DIM, NUM_CAT)
    p["wcont"], p["bcont"] = lin(ks[10], FUSE_DIM, NUM_CONT)
    return p


def fold_params(p, hw_context, hw_body, hw_face):
    """One-time algebraic fold (eval mode). Done in f32 at init, not per call."""
    fc, fb, ff = NUM_CONTEXT_FEATURES, NUM_BODY_FEATURES, NUM_FACE_FEATURES
    wfu = p["wfu"]
    wfu_c = wfu[:fc]
    wfu_b = wfu[fc:fc + fb]
    wfu_f = wfu[fc + fb:fc + fb + ff]
    wfu_cap = wfu[fc + fb + ff:]

    # caption stream reads x_context, so it folds into the context weight
    w_ctx = (p["wc"] @ wfu_c + p["wcap"] @ wfu_cap) / hw_context   # (C_ctx, 256)
    w_bod = (p["wb"] @ wfu_b) / hw_body                            # (C_body, 256)
    w_fac = (p["wf"] @ wfu_f) / hw_face                            # (C_face, 256)
    b_eff = (p["bc"] @ wfu_c + p["bb"] @ wfu_b + p["bf"] @ wfu_f
             + p["bcap"] @ wfu_cap + p["bfu"])                     # (256,)

    # eval-mode BatchNorm1d folded as an affine on the 256 lanes
    scale = p["bn_g"] * jax.lax.rsqrt(p["bn_v"] + BN_EPS)
    shift = p["bn_b"] - p["bn_m"] * scale
    w_ctx = w_ctx * scale[None, :]
    w_bod = w_bod * scale[None, :]
    w_fac = w_fac * scale[None, :]
    b_eff = b_eff * scale + shift

    # stack fc_cat | fc_cont into one lane-dense (128-wide) head weight/bias
    w_head = jnp.zeros((FUSE_DIM, HEAD_PAD), jnp.float32)
    w_head = w_head.at[:, :NUM_CAT].set(p["wcat"])
    w_head = w_head.at[:, NUM_CAT:NUM_CAT + NUM_CONT].set(p["wcont"])
    b_head = jnp.zeros((HEAD_PAD,), jnp.float32)
    b_head = b_head.at[:NUM_CAT].set(p["bcat"])
    b_head = b_head.at[NUM_CAT:NUM_CAT + NUM_CONT].set(p["bcont"])

    return {
        "w_ctx": w_ctx.astype(jnp.float32),
        "w_body": w_bod.astype(jnp.float32),
        "w_face": w_fac.astype(jnp.float32),
        "b_fuse": b_eff.reshape(1, FUSE_DIM).astype(jnp.float32),
        "w_head": w_head,
        "b_head": b_head.reshape(1, HEAD_PAD),
    }


def emotic_quadruple_stream(x_context, x_body, x_face, folded):
    N = x_context.shape[0]
    f32 = jnp.float32

    # Free layout-preserving reshape (no copy, no pad, no concat).
    def flat(x):
        return x.reshape(N, x.shape[1], -1)

    ctx, body, face = flat(x_context), flat(x_body), flat(x_face)

    # Batch tiling: single block for small N; otherwise >=2 blocks (v7x: both TCs) with a
    # tile large enough (<=512 rows) to sit near the HBM roofline but within VMEM budgets.
    if N <= 128:
        bn, n_pad = N, N
    else:
        bn = min(512, _round_up(pl.cdiv(N, 2), 8))
        n_pad = _round_up(N, bn)

    if n_pad != N:
        pad = ((0, n_pad - N), (0, 0), (0, 0))
        ctx = jnp.pad(ctx, pad)
        body = jnp.pad(body, pad)
        face = jnp.pad(face, pad)

    out = pl.pallas_call(
        _emotic_kernel,
        out_shape=jax.ShapeDtypeStruct((n_pad, HEAD_PAD), f32),
        grid=(n_pad // bn,),
        in_specs=[
            pl.BlockSpec((bn, ctx.shape[1], ctx.shape[2]), lambda i: (i, 0, 0)),
            pl.BlockSpec((bn, body.shape[1], body.shape[2]), lambda i: (i, 0, 0)),
            pl.BlockSpec((bn, face.shape[1], face.shape[2]), lambda i: (i, 0, 0)),
            pl.BlockSpec(folded["w_ctx"].shape, lambda i: (0, 0)),
            pl.BlockSpec(folded["w_body"].shape, lambda i: (0, 0)),
            pl.BlockSpec(folded["w_face"].shape, lambda i: (0, 0)),
            pl.BlockSpec((1, FUSE_DIM), lambda i: (0, 0)),
            pl.BlockSpec((FUSE_DIM, HEAD_PAD), lambda i: (0, 0)),
            pl.BlockSpec((1, HEAD_PAD), lambda i: (0, 0)),
        ],
        out_specs=pl.BlockSpec((bn, HEAD_PAD), lambda i: (i, 0)),
        compiler_params=pltpu.CompilerParams(
            dimension_semantics=("parallel",),
            vmem_limit_bytes=32 << 20,   # needed for 512-row tiles on v5e (16 MiB default)
        ),
    )(ctx, body, face,
      folded["w_ctx"], folded["w_body"], folded["w_face"], folded["b_fuse"],
      folded["w_head"], folded["b_head"])

    return out[:N, :NUM_CAT], out[:N, NUM_CAT:NUM_CAT + NUM_CONT]


def reference(x_context, x_body, x_face, p):
    """Pure-JAX reference mirroring the PyTorch forward (eval mode), from the RAW params."""
    def backbone(x, w, b):
        gap = x.reshape(x.shape[0], x.shape[1], -1).mean(axis=-1)
        return gap @ w + b

    ctx = backbone(x_context, p["wc"], p["bc"])
    body = backbone(x_body, p["wb"], p["bb"])
    face = backbone(x_face, p["wf"], p["bf"])
    cap = backbone(x_context, p["wcap"], p["bcap"])
    fuse_in = jnp.concatenate([ctx, body, face, cap], axis=1)
    z = fuse_in @ p["wfu"] + p["bfu"]
    z = (z - p["bn_m"]) * jax.lax.rsqrt(p["bn_v"] + BN_EPS) * p["bn_g"] + p["bn_b"]
    h = jnp.maximum(z, 0.0)
    return h @ p["wcat"] + p["bcat"], h @ p["wcont"] + p["bcont"]


if __name__ == "__main__":
    key = jax.random.PRNGKey(0)
    kp, kc, kb, kf = jax.random.split(key, 4)

    params = init_params(kp)
    x_context = jax.random.normal(kc, (2, 4, 16, 16), jnp.float32)  # NCHW
    x_body = jax.random.normal(kb, (2, 4, 16, 16), jnp.float32)     # NCHW
    x_face = jax.random.normal(kf, (2, 4, 8, 8), jnp.float32)       # NCHW

    folded = fold_params(params, hw_context=16 * 16, hw_body=16 * 16, hw_face=8 * 8)

    cat_out, cont_out = emotic_quadruple_stream(x_context, x_body, x_face, folded)
    jax.block_until_ready((cat_out, cont_out))

    cat_ref, cont_ref = reference(x_context, x_body, x_face, params)
    assert cat_out.shape == (2, NUM_CAT) and cont_out.shape == (2, NUM_CONT)
    assert jnp.allclose(cat_out, cat_ref, rtol=1e-4, atol=1e-4)
    assert jnp.allclose(cont_out, cont_ref, rtol=1e-4, atol=1e-4)

    print("KERNEL_OK")
</pallas_src>

<mosaic_0001>
module attributes {stable_mosaic.version = 11 : i64} {
  func.func @_emotic_kernel(%arg0: i32, %arg1: memref<2x4x256xf32, #tpu.memory_space<vmem>>, %arg2: memref<2x4x256xf32, #tpu.memory_space<vmem>>, %arg3: memref<2x4x64xf32, #tpu.memory_space<vmem>>, %arg4: memref<4x256xf32, #tpu.memory_space<vmem>>, %arg5: memref<4x256xf32, #tpu.memory_space<vmem>>, %arg6: memref<4x256xf32, #tpu.memory_space<vmem>>, %arg7: memref<1x256xf32, #tpu.memory_space<vmem>>, %arg8: memref<256x128xf32, #tpu.memory_space<vmem>>, %arg9: memref<1x128xf32, #tpu.memory_space<vmem>>, %arg10: memref<2x128xf32, #tpu.memory_space<vmem>>) attributes {dimension_semantics = [#tpu.dimension_semantics<parallel>], iteration_bounds = array<i64: 1>, scalar_prefetch = 0 : i64, scratch_operands = 0 : i64, tpu.core_type = #tpu.core_type<tc>, window_params = [{transform_indices = @transform_0, window_bounds = array<i64: 2, 4, 256>}, {transform_indices = @transform_1, window_bounds = array<i64: 2, 4, 256>}, {transform_indices = @transform_2, window_bounds = array<i64: 2, 4, 64>}, {pipeline_mode = #tpu.pipeline_mode<synchronous>, transform_indices = @transform_3, window_bounds = array<i64: 4, 256>}, {pipeline_mode = #tpu.pipeline_mode<synchronous>, transform_indices = @transform_4, window_bounds = array<i64: 4, 256>}, {pipeline_mode = #tpu.pipeline_mode<synchronous>, transform_indices = @transform_5, window_bounds = array<i64: 4, 256>}, {pipeline_mode = #tpu.pipeline_mode<synchronous>, transform_indices = @transform_6, window_bounds = array<i64: 1, 256>}, {pipeline_mode = #tpu.pipeline_mode<synchronous>, transform_indices = @transform_7, window_bounds = array<i64: 256, 128>}, {pipeline_mode = #tpu.pipeline_mode<synchronous>, transform_indices = @transform_8, window_bounds = array<i64: 1, 128>}, {transform_indices = @transform_9, window_bounds = array<i64: 2, 128>}]} {
    %c0 = arith.constant 0 : index
    %c0_0 = arith.constant 0 : index
    %c0_1 = arith.constant 0 : index
    %0 = vector.load %arg1[%c0, %c0_0, %c0_1] : memref<2x4x256xf32, #tpu.memory_space<vmem>>, vector<2x4x256xf32>
    %cst = arith.constant dense<0.000000e+00> : vector<2x4xf32>
    %1 = vector.multi_reduction <add>, %0, %cst [2] : vector<2x4x256xf32> to vector<2x4xf32>
    %c0_2 = arith.constant 0 : index
    %c0_3 = arith.constant 0 : index
    %c0_4 = arith.constant 0 : index
    %2 = vector.load %arg2[%c0_2, %c0_3, %c0_4] : memref<2x4x256xf32, #tpu.memory_space<vmem>>, vector<2x4x256xf32>
    %cst_5 = arith.constant dense<0.000000e+00> : vector<2x4xf32>
    %3 = vector.multi_reduction <add>, %2, %cst_5 [2] : vector<2x4x256xf32> to vector<2x4xf32>
    %c0_6 = arith.constant 0 : index
    %c0_7 = arith.constant 0 : index
    %c0_8 = arith.constant 0 : index
    %4 = vector.load %arg3[%c0_6, %c0_7, %c0_8] : memref<2x4x64xf32, #tpu.memory_space<vmem>>, vector<2x4x64xf32>
    %cst_9 = arith.constant dense<0.000000e+00> : vector<2x4xf32>
    %5 = vector.multi_reduction <add>, %4, %cst_9 [2] : vector<2x4x64xf32> to vector<2x4xf32>
    %c0_10 = arith.constant 0 : index
    %c0_11 = arith.constant 0 : index
    %6 = vector.load %arg4[%c0_10, %c0_11] : memref<4x256xf32, #tpu.memory_space<vmem>>, vector<4x256xf32>
    %cst_12 = arith.constant dense<0.000000e+00> : vector<2x256xf32>
    %7 = tpu.matmul %1, %6, %cst_12 {dimension_numbers = #tpu.dot_dimension_numbers<[1], [0], [0], [1], [0, 0, 1, 1], [], []>} : vector<2x4xf32>, vector<4x256xf32>, vector<2x256xf32> -> vector<2x256xf32>
    %c0_13 = arith.constant 0 : index
    %c0_14 = arith.constant 0 : index
    %8 = vector.load %arg5[%c0_13, %c0_14] : memref<4x256xf32, #tpu.memory_space<vmem>>, vector<4x256xf32>
    %cst_15 = arith.constant dense<0.000000e+00> : vector<2x256xf32>
    %9 = tpu.matmul %3, %8, %cst_15 {dimension_numbers = #tpu.dot_dimension_numbers<[1], [0], [0], [1], [0, 0, 1, 1], [], []>} : vector<2x4xf32>, vector<4x256xf32>, vector<2x256xf32> -> vector<2x256xf32>
    %10 = arith.addf %7, %9 : vector<2x256xf32>
    %c0_16 = arith.constant 0 : index
    %c0_17 = arith.constant 0 : index
    %11 = vector.load %arg6[%c0_16, %c0_17] : memref<4x256xf32, #tpu.memory_space<vmem>>, vector<4x256xf32>
    %cst_18 = arith.constant dense<0.000000e+00> : vector<2x256xf32>
    %12 = tpu.matmul %5, %11, %cst_18 {dimension_numbers = #tpu.dot_dimension_numbers<[1], [0], [0], [1], [0, 0, 1, 1], [], []>} : vector<2x4xf32>, vector<4x256xf32>, vector<2x256xf32> -> vector<2x256xf32>
    %13 = arith.addf %10, %12 : vector<2x256xf32>
    %c0_19 = arith.constant 0 : index
    %c0_20 = arith.constant 0 : index
    %14 = vector.load %arg7[%c0_19, %c0_20] : memref<1x256xf32, #tpu.memory_space<vmem>>, vector<1x256xf32>
    %15 = vector.broadcast %14 : vector<1x256xf32> to vector<2x256xf32>
    %16 = arith.addf %13, %15 : vector<2x256xf32>
    %cst_21 = arith.constant 0.000000e+00 : f32
    %17 = vector.broadcast %cst_21 : f32 to vector<2x256xf32>
    %18 = arith.maximumf %16, %17 : vector<2x256xf32>
    %c0_22 = arith.constant 0 : index
    %c0_23 = arith.constant 0 : index
    %19 = vector.load %arg8[%c0_22, %c0_23] : memref<256x128xf32, #tpu.memory_space<vmem>>, vector<256x128xf32>
    %cst_24 = arith.constant dense<0.000000e+00> : vector<2x128xf32>
    %20 = tpu.matmul %18, %19, %cst_24 {dimension_numbers = #tpu.dot_dimension_numbers<[1], [0], [0], [1], [0, 0, 1, 1], [], []>} : vector<2x256xf32>, vector<256x128xf32>, vector<2x128xf32> -> vector<2x128xf32>
    %c0_25 = arith.constant 0 : index
    %c0_26 = arith.constant 0 : index
    %21 = vector.load %arg9[%c0_25, %c0_26] : memref<1x128xf32, #tpu.memory_space<vmem>>, vector<1x128xf32>
    %22 = vector.broadcast %21 : vector<1x128xf32> to vector<2x128xf32>
    %23 = arith.addf %20, %22 : vector<2x128xf32>
    %c0_27 = arith.constant 0 : index
    %c0_28 = arith.constant 0 : index
    %24 = vector.load %arg10[%c0_27, %c0_28] : memref<2x128xf32, #tpu.memory_space<vmem>>, vector<2x128xf32>
    tpu.vector_store %arg10[%c0_27, %c0_28], %23 {strides = array<i32>} : memref<2x128xf32, #tpu.memory_space<vmem>>, vector<2x128xf32>,
    return
  }
  func.func @transform_0(%arg0: i32) -> (i32, i32, i32) {
    %c0_i32 = arith.constant 0 : i32
    %c0_i32_0 = arith.constant 0 : i32
    %c0_i32_1 = arith.constant 0 : i32
    return %arg0, %c0_i32, %c0_i32_0 : i32, i32, i32
  }
  func.func @transform_1(%arg0: i32) -> (i32, i32, i32) {
    %c0_i32 = arith.constant 0 : i32
    %c0_i32_0 = arith.constant 0 : i32
    %c0_i32_1 = arith.constant 0 : i32
    return %arg0, %c0_i32, %c0_i32_0 : i32, i32, i32
  }
  func.func @transform_2(%arg0: i32) -> (i32, i32, i32) {
    %c0_i32 = arith.constant 0 : i32
    %c0_i32_0 = arith.constant 0 : i32
    %c0_i32_1 = arith.constant 0 : i32
    return %arg0, %c0_i32, %c0_i32_0 : i32, i32, i32
  }
  func.func @transform_3(%arg0: i32) -> (i32, i32) {
    %c0_i32 = arith.constant 0 : i32
    %c0_i32_0 = arith.constant 0 : i32
    %c0_i32_1 = arith.constant 0 : i32
    return %c0_i32, %c0_i32_0 : i32, i32
  }
  func.func @transform_4(%arg0: i32) -> (i32, i32) {
    %c0_i32 = arith.constant 0 : i32
    %c0_i32_0 = arith.constant 0 : i32
    %c0_i32_1 = arith.constant 0 : i32
    return %c0_i32, %c0_i32_0 : i32, i32
  }
  func.func @transform_5(%arg0: i32) -> (i32, i32) {
    %c0_i32 = arith.constant 0 : i32
    %c0_i32_0 = arith.constant 0 : i32
    %c0_i32_1 = arith.constant 0 : i32
    return %c0_i32, %c0_i32_0 : i32, i32
  }
  func.func @transform_6(%arg0: i32) -> (i32, i32) {
    %c0_i32 = arith.constant 0 : i32
    %c0_i32_0 = arith.constant 0 : i32
    %c0_i32_1 = arith.constant 0 : i32
    return %c0_i32, %c0_i32_0 : i32, i32
  }
  func.func @transform_7(%arg0: i32) -> (i32, i32) {
    %c0_i32 = arith.constant 0 : i32
    %c0_i32_0 = arith.constant 0 : i32
    %c0_i32_1 = arith.constant 0 : i32
    return %c0_i32, %c0_i32_0 : i32, i32
  }
  func.func @transform_8(%arg0: i32) -> (i32, i32) {
    %c0_i32 = arith.constant 0 : i32
    %c0_i32_0 = arith.constant 0 : i32
    %c0_i32_1 = arith.constant 0 : i32
    return %c0_i32, %c0_i32_0 : i32, i32
  }
  func.func @transform_9(%arg0: i32) -> (i32, i32) {
    %c0_i32 = arith.constant 0 : i32
    %c0_i32_0 = arith.constant 0 : i32
    return %arg0, %c0_i32 : i32, i32
  }
}

</mosaic_0001>

<llo_original>
// kernel: tpu_custom_call.1
$region0: #{tpu_custom_call.1}
  #allocation0 [shape = 'u32[]', space=smem, size = 0x4, offset = 0x4, fixed_abs, tag = 'smem constant byte address 0x4 - core index']
  #allocation1 [shape = 'u32[144,128]{1,0:T(1,128)}', space=vmem, size = 0x12000, scoped, tag = 'internal scratch']
  %s0 = inlined_call_operand.hbm [shape: f32[2,4,256], index: 0, kind: input, shape index: {}]
  %s1 = inlined_call_operand.hbm [shape: f32[2,4,256], index: 1, kind: input, shape index: {}]
  %s2 = inlined_call_operand.hbm [shape: f32[2,4,64], index: 2, kind: input, shape index: {}]
  %s3 = inlined_call_operand.vmem [shape: f32[4,256], index: 3, kind: input, shape index: {}]
  %s4 = inlined_call_operand.hbm [shape: f32[4,256], index: 4, kind: input, shape index: {}]
  %s5 = inlined_call_operand.vmem [shape: f32[4,256], index: 5, kind: input, shape index: {}]
  %s6 = inlined_call_operand.vmem [shape: f32[1,256], index: 6, kind: input, shape index: {}]
  %s7 = inlined_call_operand.hbm [shape: f32[256,128], index: 7, kind: input, shape index: {}]
  %s8 = inlined_call_operand.vmem [shape: f32[1,128], index: 8, kind: input, shape index: {}]
  %s9 = inlined_call_operand.hbm [shape: f32[2,128], index: 9, kind: output, shape index: {}]
  %s10 = sld [smem:[#allocation0]]
  $region66: #{tpu_custom_call.1} parent=0
    _
  %s12 = ssub.s32 1, %s10
  %s13 = scalar_select 0, %s12, %s10
  $region1: #{tpu_custom_call.1} parent=0
    #allocation2 [shape = 'u8[8192]{0}', space=vmem, size = 0x2000, scoped, tag = 'input window, operand 0, single buffered']
    #allocation3 [shape = 's32[1]{0}', space=sflag, size = 0x4, scoped, tag = 'scoped memory for tpu_custom_call.1']
    #allocation4 [shape = 's32[1]{0}', space=sflag, size = 0x4, scoped, tag = 'scoped memory for tpu_custom_call.1']
    #allocation5 [shape = 'u8[8192]{0}', space=vmem, size = 0x2000, scoped, tag = 'input window, operand 1, single buffered']
    #allocation6 [shape = 's32[1]{0}', space=sflag, size = 0x4, scoped, tag = 'scoped memory for tpu_custom_call.1']
    #allocation7 [shape = 'u8[4096]{0}', space=vmem, size = 0x1000, scoped, tag = 'input window, operand 2, single buffered']
    #allocation8 [shape = 'u8[4096]{0}', space=vmem, size = 0x1000, scoped, tag = 'input window, operand 4, single buffered']
    #allocation9 [shape = 's32[1]{0}', space=sflag, size = 0x4, scoped, tag = 'scoped memory for tpu_custom_call.1']
    #allocation10 [shape = 'u8[131072]{0}', space=vmem, size = 0x20000, scoped, tag = 'input window, operand 7, single buffered']
    #allocation11 [shape = 'u8[1024]{0}', space=vmem, size = 0x400, scoped, tag = 'output window, operand 0, single buffered']
    %14 = vsyncpa [#allocation3], 0
    %15 = vsyncpa [#allocation6], 0
    %16 = vsyncpa [#allocation9], 0
    %17 = vsyncpa [#allocation4], 0
    // Predicated region
    $region2: #{tpu_custom_call.1} parent=1 // pred_check
      _
    $region3: #{tpu_custom_call.1} parent=1 // pred_check_branch
      %19 = sbr.rel (0) target = $region5
    $region4: #{tpu_custom_call.1} parent=1 // pred_region
      %s21 = ssub.s32 256, 256
      %22 = vsyncadd [#allocation3], %s21
      %s23 = sshll.u32 [#allocation2], 4
      %s24 = int_to_ptr.vmem [resolvable:$true] %s23
      %29 = dma.hbm_to_vmem [thread:$0]  %s0, 256, %s24, [#allocation3], 128, 128, 8
    $region5: #{tpu_custom_call.1} parent=1 // pred_fallthru
      _
    // Predicated region
    $region6: #{tpu_custom_call.1} parent=1 // pred_check
      _
    $region7: #{tpu_custom_call.1} parent=1 // pred_check_branch
      %31 = sbr.rel (0) target = $region9
    $region8: #{tpu_custom_call.1} parent=1 // pred_region
      %s33 = ssub.s32 256, 256
      %34 = vsyncadd [#allocation6], %s33
      %s35 = sshll.u32 [#allocation5], 4
      %s36 = int_to_ptr.vmem [resolvable:$true] %s35
      %41 = dma.hbm_to_vmem [thread:$0]  %s1, 256, %s36, [#allocation6], 128, 128, 8
    $region9: #{tpu_custom_call.1} parent=1 // pred_fallthru
      _
    // Predicated region
    $region10: #{tpu_custom_call.1} parent=1 // pred_check
      _
    $region11: #{tpu_custom_call.1} parent=1 // pred_check_branch
      %43 = sbr.rel (0) target = $region13
    $region12: #{tpu_custom_call.1} parent=1 // pred_region
      %s45 = ssub.s32 128, 128
      %46 = vsyncadd [#allocation6], %s45
      %s47 = sshll.u32 [#allocation7], 4
      %s48 = int_to_ptr.vmem [resolvable:$true] %s47
      %53 = dma.hbm_to_vmem [thread:$0]  %s2, 128, %s48, [#allocation6], 64, 64, 4
    $region13: #{tpu_custom_call.1} parent=1 // pred_fallthru
      _
    // Predicated region
    $region14: #{tpu_custom_call.1} parent=1 // pred_check
      _
    $region15: #{tpu_custom_call.1} parent=1 // pred_check_branch
      %55 = sbr.rel (0) target = $region17
    $region16: #{tpu_custom_call.1} parent=1 // pred_region
      _
    $region17: #{tpu_custom_call.1} parent=1 // pred_fallthru
      _
    // Predicated region
    $region18: #{tpu_custom_call.1} parent=1 // pred_check
      _
    $region19: #{tpu_custom_call.1} parent=1 // pred_check_branch
      %57 = sbr.rel (0) target = $region21
    $region20: #{tpu_custom_call.1} parent=1 // pred_region
      %s59 = ssub.s32 128, 128
      %60 = vsyncadd [#allocation9], %s59
      %s62 = sshll.u32 [#allocation8], 4
      %s63 = int_to_ptr.vmem [resolvable:$true] %s62
      %65 = dma.hbm_to_vmem [thread:$0]  %s4, 128, %s63, [#allocation9]
    $region21: #{tpu_custom_call.1} parent=1 // pred_fallthru
      _
    // Predicated region
    $region22: #{tpu_custom_call.1} parent=1 // pred_check
      _
    $region23: #{tpu_custom_call.1} parent=1 // pred_check_branch
      %67 = sbr.rel (0) target = $region25
    $region24: #{tpu_custom_call.1} parent=1 // pred_region
      _
    $region25: #{tpu_custom_call.1} parent=1 // pred_fallthru
      _
    // Predicated region
    $region26: #{tpu_custom_call.1} parent=1 // pred_check
      _
    $region27: #{tpu_custom_call.1} parent=1 // pred_check_branch
      %69 = sbr.rel (0) target = $region29
    $region28: #{tpu_custom_call.1} parent=1 // pred_region
      _
    $region29: #{tpu_custom_call.1} parent=1 // pred_fallthru
      _
    // Predicated region
    $region30: #{tpu_custom_call.1} parent=1 // pred_check
      _
    $region31: #{tpu_custom_call.1} parent=1 // pred_check_branch
      %71 = sbr.rel (0) target = $region33
    $region32: #{tpu_custom_call.1} parent=1 // pred_region
      %s73 = ssub.s32 4096, 4096
      %74 = vsyncadd [#allocation9], %s73
      %s75 = sshll.u32 [#allocation10], 4
      %s76 = int_to_ptr.vmem [resolvable:$true] %s75
      %81 = dma.hbm_to_vmem [thread:$0]  %s7, 4096, %s76, [#allocation9], 128, 128, 8
    $region33: #{tpu_custom_call.1} parent=1 // pred_fallthru
      _
    // Predicated region
    $region34: #{tpu_custom_call.1} parent=1 // pred_check
      _
    $region35: #{tpu_custom_call.1} parent=1 // pred_check_branch
      %83 = sbr.rel (0) target = $region37
    $region36: #{tpu_custom_call.1} parent=1 // pred_region
      _
    $region37: #{tpu_custom_call.1} parent=1 // pred_fallthru
      _
    // Predicated region
    $region38: #{tpu_custom_call.1} parent=1 // pred_check
      _
    $region39: #{tpu_custom_call.1} parent=1 // pred_check_branch
      %85 = sbr.rel (0) target = $region41
    $region40: #{tpu_custom_call.1} parent=1 // pred_region
      %86 = dma.done [#allocation3], 256
    $region41: #{tpu_custom_call.1} parent=1 // pred_fallthru
      _
    // Predicated region
    $region42: #{tpu_custom_call.1} parent=1 // pred_check
      _
    $region43: #{tpu_custom_call.1} parent=1 // pred_check_branch
      %88 = sbr.rel (0) target = $region45
    $region44: #{tpu_custom_call.1} parent=1 // pred_region
      %89 = dma.done [#allocation6], 256
    $region45: #{tpu_custom_call.1} parent=1 // pred_fallthru
      _
    // Predicated region
    $region46: #{tpu_custom_call.1} parent=1 // pred_check
      _
    $region47: #{tpu_custom_call.1} parent=1 // pred_check_branch
      %91 = sbr.rel (0) target = $region49
    $region48: #{tpu_custom_call.1} parent=1 // pred_region
      %92 = dma.done [#allocation6], 128
    $region49: #{tpu_custom_call.1} parent=1 // pred_fallthru
      _
    // Predicated region
    $region50: #{tpu_custom_call.1} parent=1 // pred_check
      _
    $region51: #{tpu_custom_call.1} parent=1 // pred_check_branch
      %94 = sbr.rel (0) target = $region53
    $region52: #{tpu_custom_call.1} parent=1 // pred_region
      %95 = dma.done [#allocation9], 128
    $region53: #{tpu_custom_call.1} parent=1 // pred_fallthru
      _
    // Predicated region
    $region54: #{tpu_custom_call.1} parent=1 // pred_check
      _
    $region55: #{tpu_custom_call.1} parent=1 // pred_check_branch
      %97 = sbr.rel (0) target = $region57
    $region56: #{tpu_custom_call.1} parent=1 // pred_region
      %98 = dma.done [#allocation9], 4096
    $region57: #{tpu_custom_call.1} parent=1 // pred_fallthru
      _
    %v99 = vld [vmem:[#allocation2] sm:$0xff]
    %v100 = vld [vmem:[#allocation2 + $0x8] sm:$0xff]
    %v103 = vcombine.high %v99, %v99
    %v104 = vcombine.high %v100, %v100
    %vm107 = vcmask 1043456
    %v108 = vsel %vm107, %v99, 0.0
    %v109 = vsel %vm107, %v103, 0.0
    %v110 = vadd.f32 %v108, %v109
    %111 = vadd.xlane.f32.xlu0 %v110
    %v112 = vpop.xlane.xlu0 %111
    %v113 = vsel %vm107, %v100, 0.0
    %v114 = vsel %vm107, %v104, 0.0
    %v115 = vadd.f32 %v113, %v114
    %116 = vadd.xlane.f32.xlu0 %v115
    %v117 = vpop.xlane.xlu0 %116
    %v118 = vld [vmem:[#allocation5] sm:$0xff]
    %v119 = vld [vmem:[#allocation5 + $0x8] sm:$0xff]
    %v122 = vcombine.high %v118, %v118
    %v123 = vcombine.high %v119, %v119
    %v126 = vsel %vm107, %v118, 0.0
    %v127 = vsel %vm107, %v122, 0.0
    %v128 = vadd.f32 %v126, %v127
    %129 = vadd.xlane.f32.xlu0 %v128
    %v130 = vpop.xlane.xlu0 %129
    %v131 = vsel %vm107, %v119, 0.0
    %v132 = vsel %vm107, %v123, 0.0
    %v133 = vadd.f32 %v131, %v132
    %134 = vadd.xlane.f32.xlu0 %v133
    %v135 = vpop.xlane.xlu0 %134
    %v136 = vld [vmem:[#allocation7] sm:$0xf]
    %v137 = vld [vmem:[#allocation7 + $0x4] sm:$0xf]
    %vm138 = vcmask 519168
    %v139 = vsel %vm138, %v136, 0.0
    %140 = vadd.xlane.f32.xlu0 %v139
    %v141 = vpop.xlane.xlu0 %140
    %v142 = vsel %vm138, %v137, 0.0
    %143 = vadd.xlane.f32.xlu0 %v142
    %v144 = vpop.xlane.xlu0 %143
    %v145 = vld [vmem:[%s3] sm:$0xff]
    %v146 = vld [vmem:[#allocation8] sm:$0xff]
    %v149 = vlaneseq
    %v150 = vand.u32 %v149, 127
    %v151 = vlaneseq
    %v152 = vshrl.u32 %v151, 7
    %v153 = vsub.s32 %v150, %v152
    %v154 = vrot.slane %v130, %v153
    %v155 = vlaneseq
    %v156 = vshrl.u32 %v155, 7
    %v157 = vsub.s32 %v150, %v156
    %v158 = vrot.slane %v135, %v157
    %vm159 = vcmask 1041409
    %v160 = vsel %vm159, %v158, %v154
    %v162 = vcombine.high %v146, %v146
    %vm163 = vcmask 31744
    %v164 = vsel %vm163, %v160, 0
    %v166 = vsel %vm107, %v146, 0
    %v168 = vsel %vm107, %v162, 0
    %170 = vmatprep.subr.mxu0 %v168
    %171 = vmatpush1.msra.mxu0 %v166
    %172 = vmatprep.subr.mxu0 0.0
    %173 = vmatpush1.msra.mxu0 0.0
    %174 = vmatprep.subr.mxu0 0.0
    %175 = vmatpush1.msra.mxu0 0.0
    %176 = vmatprep.subr.mxu0 0.0
    %177 = vmatpush1.msra.mxu0 0.0
    %178 = vmatprep.subr.mxu0 0.0
    %179 = vmatpush1.msra.mxu0 0.0
    %180 = vmatprep.subr.mxu0 0.0
    %181 = vmatpush1.msra.mxu0 0.0
    %182 = vmatprep.subr.mxu0 0.0
    %183 = vmatpush1.msra.mxu0 0.0
    %184 = vmatprep.subr.mxu0 0.0
    %185 = vmatpush1.msra.mxu0 0.0
    %186 = vmatprep.subr.mxu0 0.0
    %187 = vmatpush1.msra.mxu0 0.0
    %188 = vmatprep.subr.mxu0 0.0
    %189 = vmatpush1.msra.mxu0 0.0
    %190 = vmatprep.subr.mxu0 0.0
    %191 = vmatpush1.msra.mxu0 0.0
    %192 = vmatprep.subr.mxu0 0.0
    %193 = vmatpush1.msra.mxu0 0.0
    %194 = vmatprep.subr.mxu0 0.0
    %195 = vmatpush1.msra.mxu0 0.0
    %196 = vmatprep.subr.mxu0 0.0
    %197 = vmatpush1.msra.mxu0 0.0
    %198 = vmatprep.subr.mxu0 0.0
    %199 = vmatpush1.msra.mxu0 0.0
    %200 = vmatprep.subr.mxu0 0.0
    %201 = vmatpush1.msra.mxu0 0.0
    %202 = vmatprep.subr.mxu0 0.0
    %203 = vmatpush1.msra.mxu0 0.0
    %204 = vmatprep.subr.mxu0 0.0
    %205 = vmatpush1.msra.mxu0 0.0
    %206 = vmatprep.subr.mxu0 0.0
    %207 = vmatpush1.msra.mxu0 0.0
    %208 = vmatprep.subr.mxu0 0.0
    %209 = vmatpush1.msra.mxu0 0.0
    %210 = vmatprep.subr.mxu0 0.0
    %211 = vmatpush1.msra.mxu0 0.0
    %212 = vmatprep.subr.mxu0 0.0
    %213 = vmatpush1.msra.mxu0 0.0
    %214 = vmatprep.subr.mxu0 0.0
    %215 = vmatpush1.msra.mxu0 0.0
    %216 = vmatprep.subr.mxu0 0.0
    %217 = vmatpush1.msra.mxu0 0.0
    %218 = vmatprep.subr.mxu0 0.0
    %219 = vmatpush1.msra.mxu0 0.0
    %220 = vmatprep.subr.mxu0 0.0
    %221 = vmatpush1.msra.mxu0 0.0
    %222 = vmatprep.subr.mxu0 0.0
    %223 = vmatpush1.msra.mxu0 0.0
    %224 = vmatprep.subr.mxu0 0.0
    %225 = vmatpush1.msra.mxu0 0.0
    %226 = vmatprep.subr.mxu0 0.0
    %227 = vmatpush1.msra.mxu0 0.0
    %228 = vmatprep.subr.mxu0 0.0
    %229 = vmatpush1.msra.mxu0 0.0
    %230 = vmatprep.subr.mxu0 0.0
    %231 = vmatpush1.msra.mxu0 0.0
    %232 = vmatprep.subr.mxu0 0.0
    %233 = vmatpush1.msra.mxu0 0.0
    %234 = vmatprep.mubr.f32.mxu0 0.0
    %235 = vmatmul.mubr.f32.gmra.mrb[0].mxu0 %v164
    %v236 = vpop.f32.mrb[0].mxu0
    %v237 = vadd.f32 0.0, %v236
    %v238 = vpop.f32.mrb[0].mxu0
    %v239 = vadd.f32 0.0, %v238
    %240 = vdwg.mxu0
    %v243 = vlaneseq
    %v244 = vshrl.u32 %v243, 7
    %v245 = vsub.s32 %v150, %v244
    %v246 = vrot.slane %v112, %v245
    %v247 = vlaneseq
    %v248 = vshrl.u32 %v247, 7
    %v249 = vsub.s32 %v150, %v248
    %v250 = vrot.slane %v117, %v249
    %v251 = vsel %vm159, %v250, %v246
    %v253 = vcombine.high %v145, %v145
    %v254 = vsel %vm163, %v251, 0
    %v256 = vsel %vm107, %v145, 0
    %v258 = vsel %vm107, %v253, 0
    %260 = vmatprep.subr.mxu0 %v258
    %261 = vmatpush1.msra.mxu0 %v256
    %262 = vmatprep.subr.mxu0 0.0
    %263 = vmatpush1.msra.mxu0 0.0
    %264 = vmatprep.subr.mxu0 0.0
    %265 = vmatpush1.msra.mxu0 0.0
    %266 = vmatprep.subr.mxu0 0.0
    %267 = vmatpush1.msra.mxu0 0.0
    %268 = vmatprep.subr.mxu0 0.0
    %269 = vmatpush1.msra.mxu0 0.0
    %270 = vmatprep.subr.mxu0 0.0
    %271 = vmatpush1.msra.mxu0 0.0
    %272 = vmatprep.subr.mxu0 0.0
    %273 = vmatpush1.msra.mxu0 0.0
    %274 = vmatprep.subr.mxu0 0.0
    %275 = vmatpush1.msra.mxu0 0.0
    %276 = vmatprep.subr.mxu0 0.0
    %277 = vmatpush1.msra.mxu0 0.0
    %278 = vmatprep.subr.mxu0 0.0
    %279 = vmatpush1.msra.mxu0 0.0
    %280 = vmatprep.subr.mxu0 0.0
    %281 = vmatpush1.msra.mxu0 0.0
    %282 = vmatprep.subr.mxu0 0.0
    %283 = vmatpush1.msra.mxu0 0.0
    %284 = vmatprep.subr.mxu0 0.0
    %285 = vmatpush1.msra.mxu0 0.0
    %286 = vmatprep.subr.mxu0 0.0
    %287 = vmatpush1.msra.mxu0 0.0
    %288 = vmatprep.subr.mxu0 0.0
    %289 = vmatpush1.msra.mxu0 0.0
    %290 = vmatprep.subr.mxu0 0.0
    %291 = vmatpush1.msra.mxu0 0.0
    %292 = vmatprep.subr.mxu0 0.0
    %293 = vmatpush1.msra.mxu0 0.0
    %294 = vmatprep.subr.mxu0 0.0
    %295 = vmatpush1.msra.mxu0 0.0
    %296 = vmatprep.subr.mxu0 0.0
    %297 = vmatpush1.msra.mxu0 0.0
    %298 = vmatprep.subr.mxu0 0.0
    %299 = vmatpush1.msra.mxu0 0.0
    %300 = vmatprep.subr.mxu0 0.0
    %301 = vmatpush1.msra.mxu0 0.0
    %302 = vmatprep.subr.mxu0 0.0
    %303 = vmatpush1.msra.mxu0 0.0
    %304 = vmatprep.subr.mxu0 0.0
    %305 = vmatpush1.msra.mxu0 0.0
    %306 = vmatprep.subr.mxu0 0.0
    %307 = vmatpush1.msra.mxu0 0.0
    %308 = vmatprep.subr.mxu0 0.0
    %309 = vmatpush1.msra.mxu0 0.0
    %310 = vmatprep.subr.mxu0 0.0
    %311 = vmatpush1.msra.mxu0 0.0
    %312 = vmatprep.subr.mxu0 0.0
    %313 = vmatpush1.msra.mxu0 0.0
    %314 = vmatprep.subr.mxu0 0.0
    %315 = vmatpush1.msra.mxu0 0.0
    %316 = vmatprep.subr.mxu0 0.0
    %317 = vmatpush1.msra.mxu0 0.0
    %318 = vmatprep.subr.mxu0 0.0
    %319 = vmatpush1.msra.mxu0 0.0
    %320 = vmatprep.subr.mxu0 0.0
    %321 = vmatpush1.msra.mxu0 0.0
    %322 = vmatprep.subr.mxu0 0.0
    %323 = vmatpush1.msra.mxu0 0.0
    %324 = vmatprep.mubr.f32.mxu0 0.0
    %325 = vmatmul.mubr.f32.gmra.mrb[0].mxu0 %v254
    %v326 = vpop.f32.mrb[0].mxu0
    %v327 = vadd.f32 %v237, %v326
    %v328 = vpop.f32.mrb[0].mxu0
    %v329 = vadd.f32 %v239, %v328
    %330 = vdwg.mxu0
    %v331 = vld [vmem:[%s5] sm:$0xff]
    %v334 = vlaneseq
    %v335 = vshrl.u32 %v334, 7
    %v336 = vsub.s32 %v150, %v335
    %v337 = vrot.slane %v141, %v336
    %v338 = vlaneseq
    %v339 = vshrl.u32 %v338, 7
    %v340 = vsub.s32 %v150, %v339
    %v341 = vrot.slane %v144, %v340
    %v342 = vsel %vm159, %v341, %v337
    %v344 = vcombine.high %v331, %v331
    %v345 = vsel %vm163, %v342, 0
    %v347 = vsel %vm107, %v331, 0
    %v349 = vsel %vm107, %v344, 0
    %351 = vmatprep.subr.mxu0 %v349
    %352 = vmatpush1.msra.mxu0 %v347
    %353 = vmatprep.subr.mxu0 0.0
    %354 = vmatpush1.msra.mxu0 0.0
    %355 = vmatprep.subr.mxu0 0.0
    %356 = vmatpush1.msra.mxu0 0.0
    %357 = vmatprep.subr.mxu0 0.0
    %358 = vmatpush1.msra.mxu0 0.0
    %359 = vmatprep.subr.mxu0 0.0
    %360 = vmatpush1.msra.mxu0 0.0
    %361 = vmatprep.subr.mxu0 0.0
    %362 = vmatpush1.msra.mxu0 0.0
    %363 = vmatprep.subr.mxu0 0.0
    %364 = vmatpush1.msra.mxu0 0.0
    %365 = vmatprep.subr.mxu0 0.0
    %366 = vmatpush1.msra.mxu0 0.0
    %367 = vmatprep.subr.mxu0 0.0
    %368 = vmatpush1.msra.mxu0 0.0
    %369 = vmatprep.subr.mxu0 0.0
    %370 = vmatpush1.msra.mxu0 0.0
    %371 = vmatprep.subr.mxu0 0.0
    %372 = vmatpush1.msra.mxu0 0.0
    %373 = vmatprep.subr.mxu0 0.0
    %374 = vmatpush1.msra.mxu0 0.0
    %375 = vmatprep.subr.mxu0 0.0
    %376 = vmatpush1.msra.mxu0 0.0
    %377 = vmatprep.subr.mxu0 0.0
    %378 = vmatpush1.msra.mxu0 0.0
    %379 = vmatprep.subr.mxu0 0.0
    %380 = vmatpush1.msra.mxu0 0.0
    %381 = vmatprep.subr.mxu0 0.0
    %382 = vmatpush1.msra.mxu0 0.0
    %383 = vmatprep.subr.mxu0 0.0
    %384 = vmatpush1.msra.mxu0 0.0
    %385 = vmatprep.subr.mxu0 0.0
    %386 = vmatpush1.msra.mxu0 0.0
    %387 = vmatprep.subr.mxu0 0.0
    %388 = vmatpush1.msra.mxu0 0.0
    %389 = vmatprep.subr.mxu0 0.0
    %390 = vmatpush1.msra.mxu0 0.0
    %391 = vmatprep.subr.mxu0 0.0
    %392 = vmatpush1.msra.mxu0 0.0
    %393 = vmatprep.subr.mxu0 0.0
    %394 = vmatpush1.msra.mxu0 0.0
    %395 = vmatprep.subr.mxu0 0.0
    %396 = vmatpush1.msra.mxu0 0.0
    %397 = vmatprep.subr.mxu0 0.0
    %398 = vmatpush1.msra.mxu0 0.0
    %399 = vmatprep.subr.mxu0 0.0
    %400 = vmatpush1.msra.mxu0 0.0
    %401 = vmatprep.subr.mxu0 0.0
    %402 = vmatpush1.msra.mxu0 0.0
    %403 = vmatprep.subr.mxu0 0.0
    %404 = vmatpush1.msra.mxu0 0.0
    %405 = vmatprep.subr.mxu0 0.0
    %406 = vmatpush1.msra.mxu0 0.0
    %407 = vmatprep.subr.mxu0 0.0
    %408 = vmatpush1.msra.mxu0 0.0
    %409 = vmatprep.subr.mxu0 0.0
    %410 = vmatpush1.msra.mxu0 0.0
    %411 = vmatprep.subr.mxu0 0.0
    %412 = vmatpush1.msra.mxu0 0.0
    %413 = vmatprep.subr.mxu0 0.0
    %414 = vmatpush1.msra.mxu0 0.0
    %415 = vmatprep.mubr.f32.mxu0 0.0
    %416 = vmatmul.mubr.f32.gmra.mrb[0].mxu0 %v345
    %v417 = vpop.f32.mrb[0].mxu0
    %v418 = vadd.f32 0.0, %v417
    %v419 = vpop.f32.mrb[0].mxu0
    %v420 = vadd.f32 0.0, %v419
    %421 = vdwg.mxu0
    %v422 = vadd.f32 %v327, %v418
    %v423 = vadd.f32 %v329, %v420
    %v424 = vld [vmem:[%s6] sm:$0x3]
    %v426 = vlaneseq
    %v427 = vshrl.u32 %v426, 7
    %v428 = vsub.s32 0, %v427
    %v429 = vrot.slane %v424, %v428
    %v430 = vlaneseq
    %v431 = vshrl.u32 %v430, 7
    %v432 = vsub.s32 1, %v431
    %v433 = vrot.slane %v424, %v432
    %v436 = vadd.f32 %v422, %v429
    %v437 = vadd.f32 %v423, %v433
    %v438 = vmax.f32 %v436, 0.0
    %v439 = vmax.f32 %v437, 0.0
    %v440 = vld [vmem:[#allocation10] sm:$0xff]
    %v441 = vld [vmem:[#allocation10 + $0x8] sm:$0xff]
    %v442 = vld [vmem:[#allocation10 + $0x10] sm:$0xff]
    %v443 = vld [vmem:[#allocation10 + $0x18] sm:$0xff]
    %v444 = vld [vmem:[#allocation10 + $0x20] sm:$0xff]
    %v445 = vld [vmem:[#allocation10 + $0x28] sm:$0xff]
    %v446 = vld [vmem:[#allocation10 + $0x30] sm:$0xff]
    %v447 = vld [vmem:[#allocation10 + $0x38] sm:$0xff]
    %v448 = vld [vmem:[#allocation10 + $0x40] sm:$0xff]
    %v449 = vld [vmem:[#allocation10 + $0x48] sm:$0xff]
    %v450 = vld [vmem:[#allocation10 + $0x50] sm:$0xff]
    %v451 = vld [vmem:[#allocation10 + $0x58] sm:$0xff]
    %v452 = vld [vmem:[#allocation10 + $0x60] sm:$0xff]
    %v453 = vld [vmem:[#allocation10 + $0x68] sm:$0xff]
    %v454 = vld [vmem:[#allocation10 + $0x70] sm:$0xff]
    %v455 = vld [vmem:[#allocation10 + $0x78] sm:$0xff]
    %v456 = vld [vmem:[#allocation10 + $0x80] sm:$0xff]
    %v457 = vld [vmem:[#allocation10 + $0x88] sm:$0xff]
    %v458 = vld [vmem:[#allocation10 + $0x90] sm:$0xff]
    %v459 = vld [vmem:[#allocation10 + $0x98] sm:$0xff]
    %v460 = vld [vmem:[#allocation10 + $0xa0] sm:$0xff]
    %v461 = vld [vmem:[#allocation10 + $0xa8] sm:$0xff]
    %v462 = vld [vmem:[#allocation10 + $0xb0] sm:$0xff]
    %v463 = vld [vmem:[#allocation10 + $0xb8] sm:$0xff]
    %v464 = vld [vmem:[#allocation10 + $0xc0] sm:$0xff]
    %v465 = vld [vmem:[#allocation10 + $0xc8] sm:$0xff]
    %v466 = vld [vmem:[#allocation10 + $0xd0] sm:$0xff]
    %v467 = vld [vmem:[#allocation10 + $0xd8] sm:$0xff]
    %v468 = vld [vmem:[#allocation10 + $0xe0] sm:$0xff]
    %v469 = vld [vmem:[#allocation10 + $0xe8] sm:$0xff]
    %v470 = vld [vmem:[#allocation10 + $0xf0] sm:$0xff]
    %v471 = vld [vmem:[#allocation10 + $0xf8] sm:$0xff]
    %v472 = vld [vmem:[%s8] sm:$0x1]
    %v474 = vlaneseq
    %v475 = vshrl.u32 %v474, 7
    %v476 = vsub.s32 0, %v475
    %v477 = vrot.slane %v472, %v476
    %479 = vmatprep.subr.mxu0 0.0
    %480 = vmatpush1.msra.mxu0 %v440
    %481 = vmatprep.subr.mxu0 0.0
    %482 = vmatpush1.msra.mxu0 %v441
    %483 = vmatprep.subr.mxu0 0.0
    %484 = vmatpush1.msra.mxu0 %v442
    %485 = vmatprep.subr.mxu0 0.0
    %486 = vmatpush1.msra.mxu0 %v443
    %487 = vmatprep.subr.mxu0 0.0
    %488 = vmatpush1.msra.mxu0 %v444
    %489 = vmatprep.subr.mxu0 0.0
    %490 = vmatpush1.msra.mxu0 %v445
    %491 = vmatprep.subr.mxu0 0.0
    %492 = vmatpush1.msra.mxu0 %v446
    %493 = vmatprep.subr.mxu0 0.0
    %494 = vmatpush1.msra.mxu0 %v447
    %495 = vmatprep.subr.mxu0 0.0
    %496 = vmatpush1.msra.mxu0 %v448
    %497 = vmatprep.subr.mxu0 0.0
    %498 = vmatpush1.msra.mxu0 %v449
    %499 = vmatprep.subr.mxu0 0.0
    %500 = vmatpush1.msra.mxu0 %v450
    %501 = vmatprep.subr.mxu0 0.0
    %502 = vmatpush1.msra.mxu0 %v451
    %503 = vmatprep.subr.mxu0 0.0
    %504 = vmatpush1.msra.mxu0 %v452
    %505 = vmatprep.subr.mxu0 0.0
    %506 = vmatpush1.msra.mxu0 %v453
    %507 = vmatprep.subr.mxu0 0.0
    %508 = vmatpush1.msra.mxu0 %v454
    %509 = vmatprep.subr.mxu0 0.0
    %510 = vmatpush1.msra.mxu0 %v455
    %511 = vmatprep.subr.mxu0 0.0
    %512 = vmatpush1.msra.mxu0 %v456
    %513 = vmatprep.subr.mxu0 0.0
    %514 = vmatpush1.msra.mxu0 %v457
    %515 = vmatprep.subr.mxu0 0.0
    %516 = vmatpush1.msra.mxu0 %v458
    %517 = vmatprep.subr.mxu0 0.0
    %518 = vmatpush1.msra.mxu0 %v459
    %519 = vmatprep.subr.mxu0 0.0
    %520 = vmatpush1.msra.mxu0 %v460
    %521 = vmatprep.subr.mxu0 0.0
    %522 = vmatpush1.msra.mxu0 %v461
    %523 = vmatprep.subr.mxu0 0.0
    %524 = vmatpush1.msra.mxu0 %v462
    %525 = vmatprep.subr.mxu0 0.0
    %526 = vmatpush1.msra.mxu0 %v463
    %527 = vmatprep.subr.mxu0 0.0
    %528 = vmatpush1.msra.mxu0 %v464
    %529 = vmatprep.subr.mxu0 0.0
    %530 = vmatpush1.msra.mxu0 %v465
    %531 = vmatprep.subr.mxu0 0.0
    %532 = vmatpush1.msra.mxu0 %v466
    %533 = vmatprep.subr.mxu0 0.0
    %534 = vmatpush1.msra.mxu0 %v467
    %535 = vmatprep.subr.mxu0 0.0
    %536 = vmatpush1.msra.mxu0 %v468
    %537 = vmatprep.subr.mxu0 0.0
    %538 = vmatpush1.msra.mxu0 %v469
    %539 = vmatprep.subr.mxu0 0.0
    %540 = vmatpush1.msra.mxu0 %v470
    %541 = vmatprep.subr.mxu0 0.0
    %542 = vmatpush1.msra.mxu0 %v471
    %543 = vmatprep.mubr.f32.mxu0 %v439
    %544 = vmatmul.mubr.f32.gmra.mrb[0].mxu0 %v438
    %v545 = vpop.f32.mrb[0].mxu0
    %v546 = vadd.f32 %v477, %v545
    %v547 = vpop.f32.mrb[0].mxu0
    %548 = vdwg.mxu0
    %549 = vst [vmem:[#allocation11] sm:$0x3] %v546
    // Predicated region
    $region58: #{tpu_custom_call.1} parent=1 // pred_check
      _
    $region59: #{tpu_custom_call.1} parent=1 // pred_check_branch
      %551 = sbr.rel (0) target = $region61
    $region60: #{tpu_custom_call.1} parent=1 // pred_region
      %s553 = ssub.s32 32, 32
      %554 = vsyncadd [#allocation4], %s553
      %s556 = sshll.u32 [#allocation11], 4
      %s557 = int_to_ptr.vmem [resolvable:$true] %s556
      %559 = dma.vmem_to_hbm [thread:$0]  %s557, 32, %s9, [#allocation4]
    $region61: #{tpu_custom_call.1} parent=1 // pred_fallthru
      _
    // Predicated region
    $region62: #{tpu_custom_call.1} parent=1 // pred_check
      _
    $region63: #{tpu_custom_call.1} parent=1 // pred_check_branch
      %561 = sbr.rel (0) target = $region65
    $region64: #{tpu_custom_call.1} parent=1 // pred_region
      %562 = dma.done [#allocation4], 32
    $region65: #{tpu_custom_call.1} parent=1 // pred_fallthru
      _
    %563 = vsyncpa [#allocation3], 1
    %564 = vsyncpa [#allocation6], 1
    %565 = vsyncpa [#allocation9], 1
    %566 = vsyncpa [#allocation4], 1

</llo_original>
